<compile_context>
chip_gen: v6e
topology: v6e:2x2x1
jax: 0.10.0
libtpu: 0.0.40
codegen_flags: <defaults>
</compile_context>

<pallas_src>
import functools

import jax
import jax.numpy as jnp
from jax import lax
from jax.experimental import pallas as pl
from jax.experimental.pallas import tpu as pltpu
import numpy as np

LANES = 128
_MIB = 1024 * 1024


def _round_up(x, m):
    return ((x + m - 1) // m) * m


def _cdiv(a, b):
    return (a + b - 1) // b


def _tpu_config():
    """Generation-dependent knobs: (num_cores, vmem_limit_bytes,
    logits_block_target_bytes, hw_tile_cap)."""
    try:
        kind = jax.devices()[0].device_kind.lower()
    except Exception:
        kind = ""
    if "v7" in kind:
        # 2 TensorCores, 64 MiB VMEM, 3.2 TB/s HBM: shard across cores,
        # moderate blocks so logits dbuf + temps stay well under 64 MiB.
        return 2, 40 * _MIB, 3 * _MIB, 4096
    if "v5" in kind or "v6" in kind:
        # 1 TensorCore, 128 MiB VMEM: big HBM-roofline-friendly blocks and an
        # explicit scoped-VMEM raise (defaults are 16/32 MiB).
        return 1, 64 * _MIB, 8 * _MIB, 8192
    # Unknown / older generation: stay under the conservative scoped default.
    return 1, None, 2 * _MIB, 2048


NUM_CORES, VMEM_LIMIT, CE_BLOCK_TARGET, HW_TILE_CAP = _tpu_config()


def _compiler_params(semantics):
    return pltpu.CompilerParams(dimension_semantics=semantics,
                                vmem_limit_bytes=VMEM_LIMIT)


# ----------------------------- Pallas kernels -------------------------------

def _l1_partial_kernel(diff_ref, out_ref):
    @pl.when(pl.program_id(1) == 0)
    def _():
        out_ref[...] = jnp.zeros_like(out_ref)

    d = diff_ref[...].astype(jnp.float32)                 # (TR, 128)
    tr = d.shape[0]
    # Layout-preserving sublane-group reshape -> pure VPU adds into the resident
    # (8, 128) partial; the cross-lane reduce is deferred to the wrapper.
    out_ref[...] = out_ref[...] + jnp.abs(d).reshape(tr // 8, 8, LANES).sum(axis=0)


def _ce_partial_kernel(logits_ref, tgt_ref, out_ref):
    @pl.when(pl.program_id(2) == 0)
    def _():
        out_ref[...] = jnp.zeros_like(out_ref)

    num_cls = logits_ref.shape[0]                         # leading class axis
    tgt = tgt_ref[...]                                    # (TN, HT) int32, -1 == pad

    # Unrolled per-class passes: intermediates stay (TN, HT)-sized (no (C,TN,HT)
    # f32 temporaries), and the shifted logits are reused for exp and "picked".
    m = logits_ref[0].astype(jnp.float32)                 # running max over classes
    for c in range(1, num_cls):
        m = jnp.maximum(m, logits_ref[c].astype(jnp.float32))
    sumexp = jnp.zeros_like(m)
    picked = jnp.zeros_like(m)                            # logit[tgt] - m
    for c in range(num_cls):
        s = logits_ref[c].astype(jnp.float32) - m
        sumexp = sumexp + jnp.exp(s)
        picked = picked + jnp.where(tgt == c, s, 0.0)
    # lse - logit[tgt] == log(sumexp) - (logit[tgt] - m)
    loss_map = jnp.where(tgt >= 0, jnp.log(sumexp) - picked, 0.0)   # (TN, HT)

    tn, ht = loss_map.shape
    out_ref[...] = out_ref[...] + loss_map.reshape(tn // 8, 8, ht).sum(axis=0)


# ------------------------------- wrappers ------------------------------------

def l1_pred_loss(positions, movement, offset):
    # target = -(pos + mov)  =>  |target - offset| == |pos + mov + offset|.
    # The slice/pad/reshape wrapper pass already exists; fusing the 3-way add into
    # it cuts the L1 HBM traffic to a single summed slab + one kernel read.
    diff = positions[:, :-1] + movement[:, 1:, -1] + offset      # (B, T-1, D)
    L = diff.size                                                # true divisor

    r_needed = _cdiv(L, LANES)
    TR = max(8, min(2048, _round_up(_cdiv(r_needed, NUM_CORES), 8)))
    Rp = _round_up(max(r_needed, 1), NUM_CORES * TR)
    tiles_per_core = Rp // (NUM_CORES * TR)
    Lp = Rp * LANES

    flat = jnp.pad(diff.reshape(-1), (0, Lp - L))   # zero pad contributes 0 to |.|
    slab = flat.reshape(Rp, LANES)

    partials = pl.pallas_call(
        _l1_partial_kernel,
        out_shape=jax.ShapeDtypeStruct((NUM_CORES * 8, LANES), jnp.float32),
        grid=(NUM_CORES, tiles_per_core),
        in_specs=[pl.BlockSpec((TR, LANES),
                               lambda c, j: (c * tiles_per_core + j, 0))],
        out_specs=pl.BlockSpec((8, LANES), lambda c, j: (c, 0)),
        compiler_params=_compiler_params(("parallel", "arbitrary")),
    )(slab)
    return jnp.sum(partials) / L


def ce_mask_loss(out_mask, mask):
    B, T, C, H, W = out_mask.shape
    N = B * T
    HW = H * W
    n_pix = N * HW                                  # true divisor
    itemsize = out_mask.dtype.itemsize              # bf16 inputs welcome (f32 math in-kernel)

    # Class-major (C, N, HW): block minor dims become (TN, HW_TILE), so C < 8
    # causes no sublane padding.  The transpose rides along with the wrapper
    # pad/reshape copy.
    logits = jnp.transpose(out_mask.reshape(N, C, HW), (1, 0, 2))   # (C, N, HW)
    tgt = mask.reshape(N, HW).astype(jnp.int32)                     # -1 marks padding
    # TODO(synk): narrow (uint8/int16) target streaming would need packed-sublane
    # aware TN sizing; int32 targets keep the layout simple.

    # --- HW tile axis: bounds block and resident-partial size on every generation.
    HWp = _round_up(HW, LANES)
    HT = min(HWp, HW_TILE_CAP)
    HWpad = _round_up(HWp, HT)
    n_hw_tiles = HWpad // HT

    # --- TN from the per-generation logits-block byte budget.
    bytes_per_sample = C * HT * itemsize
    TN = max(8, (CE_BLOCK_TARGET // bytes_per_sample) // 8 * 8)
    TN = min(TN, _round_up(_cdiv(N, NUM_CORES), 8))
    Np = _round_up(N, NUM_CORES * TN)
    steps_per_core = Np // (NUM_CORES * TN)

    if HWpad != HW or Np != N:
        logits = jnp.pad(logits, ((0, 0), (0, Np - N), (0, HWpad - HW)))
        tgt = jnp.pad(tgt, ((0, Np - N), (0, HWpad - HW)), constant_values=-1)

    partials = pl.pallas_call(
        _ce_partial_kernel,
        out_shape=jax.ShapeDtypeStruct((NUM_CORES * 8, HWpad), jnp.float32),
        grid=(NUM_CORES, n_hw_tiles, steps_per_core),
        in_specs=[
            pl.BlockSpec((C, TN, HT),
                         lambda c, t, j: (0, c * steps_per_core + j, t)),
            pl.BlockSpec((TN, HT),
                         lambda c, t, j: (c * steps_per_core + j, t)),
        ],
        out_specs=pl.BlockSpec((8, HT), lambda c, t, j: (c, t)),
        compiler_params=_compiler_params(("parallel", "parallel", "arbitrary")),
    )(logits, tgt)
    return jnp.sum(partials) / n_pix


@functools.partial(jax.jit, static_argnames=("loss_type",))
def seg_trace_loss(offset, positions, movement, mask, out_mask,
                   loss_type=("l1", "ce", 1.0)):
    # TODO(synk): only the default ['l1', 'ce', 1] branch is implemented
    # (smooth_l1 / mse variants of the module are unused by default).
    assert loss_type[0] == "l1" and loss_type[1] == "ce"
    pred_loss = l1_pred_loss(positions, movement, offset)
    mask_loss = ce_mask_loss(out_mask, mask)
    total = pred_loss + loss_type[-1] * mask_loss
    # Return device scalars; the PyTorch module's .cpu().item() pull is left to
    # the caller (no host sync inside the jitted loss).
    return total, {"pred_loss": pred_loss, "mask_loss": mask_loss}


# ------------------------------ reference ------------------------------------

def _ref_loss(offset, positions, movement, mask, out_mask):
    target = -1.0 * (positions[:, :-1] + movement[:, 1:, -1])
    pred = jnp.mean(jnp.abs(target - offset))
    B, T, C, H, W = out_mask.shape
    logits = out_mask.reshape(-1, C, H, W)
    tgt = mask.reshape(-1, H, W)
    logp = jax.nn.log_softmax(logits, axis=1)
    picked = jnp.take_along_axis(logp, tgt[:, None].astype(jnp.int32), axis=1)[:, 0]
    ce = -jnp.mean(picked)
    return pred + ce, pred, ce


# --------------------------------- main ---------------------------------------

if __name__ == "__main__":
    key = jax.random.PRNGKey(0)
    kp, km, ko, kmask, kom = jax.random.split(key, 5)

    B, T, D, K, C, H, W = 2, 8, 4, 3, 4, 16, 16

    positions = jax.random.normal(kp, (B, T, D), dtype=jnp.float32)
    movement = jax.random.normal(km, (B, T, K, D), dtype=jnp.float32)
    offset = jax.random.normal(ko, (B, T - 1, D), dtype=jnp.float32)
    mask = jax.random.randint(kmask, (B, T, H, W), 0, C, dtype=jnp.int32)
    out_mask = jax.random.normal(kom, (B, T, C, H, W), dtype=jnp.float32)

    total, parts = seg_trace_loss(offset, positions, movement, mask, out_mask)
    total = jax.block_until_ready(total)

    ref_total, ref_pred, ref_ce = _ref_loss(offset, positions, movement, mask, out_mask)
    assert np.allclose(float(total), float(ref_total), rtol=1e-5, atol=1e-5), \
        (float(total), float(ref_total))
    assert np.allclose(float(parts["pred_loss"]), float(ref_pred), rtol=1e-5, atol=1e-5)
    assert np.allclose(float(parts["mask_loss"]), float(ref_ce), rtol=1e-5, atol=1e-5)

    print("KERNEL_OK")
</pallas_src>

<mosaic_0001>
module attributes {stable_mosaic.version = 11 : i64} {
  func.func @_ce_partial_kernel(%arg0: i32, %arg1: i32, %arg2: i32, %arg3: memref<4x16x256xf32, #tpu.memory_space<vmem>>, %arg4: memref<16x256xi32, #tpu.memory_space<vmem>>, %arg5: memref<8x256xf32, #tpu.memory_space<vmem>>) attributes {dimension_semantics = [#tpu.dimension_semantics<parallel>, #tpu.dimension_semantics<parallel>, #tpu.dimension_semantics<arbitrary>], iteration_bounds = array<i64: 1, 1, 1>, scalar_prefetch = 0 : i64, scratch_operands = 0 : i64, tpu.core_type = #tpu.core_type<tc>, window_params = [{transform_indices = @transform_0, window_bounds = array<i64: 4, 16, 256>}, {transform_indices = @transform_1, window_bounds = array<i64: 16, 256>}, {transform_indices = @transform_2, window_bounds = array<i64: 8, 256>}]} {
    %c0_i32 = arith.constant 0 : i32
    %0 = arith.cmpi eq, %arg2, %c0_i32 : i32
    %1 = arith.extui %0 : i1 to i32
    %c0_i32_0 = arith.constant 0 : i32
    %2 = arith.cmpi ne, %1, %c0_i32_0 : i32
    scf.if %2 {
      %cst_36 = arith.constant 0.000000e+00 : f32
      %68 = vector.broadcast %cst_36 : f32 to vector<8x256xf32>
      %c0_37 = arith.constant 0 : index
      %c0_38 = arith.constant 0 : index
      %69 = vector.load %arg5[%c0_37, %c0_38] : memref<8x256xf32, #tpu.memory_space<vmem>>, vector<8x256xf32>
      tpu.vector_store %arg5[%c0_37, %c0_38], %68 {strides = array<i32>} : memref<8x256xf32, #tpu.memory_space<vmem>>, vector<8x256xf32>,
    } else {
    }
    %c0 = arith.constant 0 : index
    %c0_1 = arith.constant 0 : index
    %3 = vector.load %arg4[%c0, %c0_1] : memref<16x256xi32, #tpu.memory_space<vmem>>, vector<16x256xi32>
    %c0_2 = arith.constant 0 : index
    %c0_3 = arith.constant 0 : index
    %c0_4 = arith.constant 0 : index
    %4 = vector.load %arg3[%c0_2, %c0_3, %c0_4] : memref<4x16x256xf32, #tpu.memory_space<vmem>>, vector<1x16x256xf32>
    %5 = vector.shape_cast %4 : vector<1x16x256xf32> to vector<16x256xf32>
    %c1 = arith.constant 1 : index
    %c0_5 = arith.constant 0 : index
    %c0_6 = arith.constant 0 : index
    %6 = vector.load %arg3[%c1, %c0_5, %c0_6] : memref<4x16x256xf32, #tpu.memory_space<vmem>>, vector<1x16x256xf32>
    %7 = vector.shape_cast %6 : vector<1x16x256xf32> to vector<16x256xf32>
    %8 = arith.maximumf %5, %7 : vector<16x256xf32>
    %c2 = arith.constant 2 : index
    %c0_7 = arith.constant 0 : index
    %c0_8 = arith.constant 0 : index
    %9 = vector.load %arg3[%c2, %c0_7, %c0_8] : memref<4x16x256xf32, #tpu.memory_space<vmem>>, vector<1x16x256xf32>
    %10 = vector.shape_cast %9 : vector<1x16x256xf32> to vector<16x256xf32>
    %11 = arith.maximumf %8, %10 : vector<16x256xf32>
    %c3 = arith.constant 3 : index
    %c0_9 = arith.constant 0 : index
    %c0_10 = arith.constant 0 : index
    %12 = vector.load %arg3[%c3, %c0_9, %c0_10] : memref<4x16x256xf32, #tpu.memory_space<vmem>>, vector<1x16x256xf32>
    %13 = vector.shape_cast %12 : vector<1x16x256xf32> to vector<16x256xf32>
    %14 = arith.maximumf %11, %13 : vector<16x256xf32>
    %cst = arith.constant 0.000000e+00 : f32
    %15 = vector.broadcast %cst : f32 to vector<16x256xf32>
    %cst_11 = arith.constant 0.000000e+00 : f32
    %16 = vector.broadcast %cst_11 : f32 to vector<16x256xf32>
    %c0_12 = arith.constant 0 : index
    %c0_13 = arith.constant 0 : index
    %c0_14 = arith.constant 0 : index
    %17 = vector.load %arg3[%c0_12, %c0_13, %c0_14] : memref<4x16x256xf32, #tpu.memory_space<vmem>>, vector<1x16x256xf32>
    %18 = vector.shape_cast %17 : vector<1x16x256xf32> to vector<16x256xf32>
    %19 = arith.subf %18, %14 : vector<16x256xf32>
    %20 = math.exp %19 : vector<16x256xf32>
    %21 = arith.addf %15, %20 : vector<16x256xf32>
    %c0_i32_15 = arith.constant 0 : i32
    %22 = vector.broadcast %c0_i32_15 : i32 to vector<16x256xi32>
    %23 = arith.cmpi eq, %3, %22 : vector<16x256xi32>
    %cst_16 = arith.constant 0.000000e+00 : f32
    %24 = vector.broadcast %cst_16 : f32 to vector<16x256xf32>
    %25 = arith.select %23, %19, %24 : vector<16x256xi1>, vector<16x256xf32>
    %26 = arith.addf %16, %25 : vector<16x256xf32>
    %c1_17 = arith.constant 1 : index
    %c0_18 = arith.constant 0 : index
    %c0_19 = arith.constant 0 : index
    %27 = vector.load %arg3[%c1_17, %c0_18, %c0_19] : memref<4x16x256xf32, #tpu.memory_space<vmem>>, vector<1x16x256xf32>
    %28 = vector.shape_cast %27 : vector<1x16x256xf32> to vector<16x256xf32>
    %29 = arith.subf %28, %14 : vector<16x256xf32>
    %30 = math.exp %29 : vector<16x256xf32>
    %31 = arith.addf %21, %30 : vector<16x256xf32>
    %c1_i32 = arith.constant 1 : i32
    %32 = vector.broadcast %c1_i32 : i32 to vector<16x256xi32>
    %33 = arith.cmpi eq, %3, %32 : vector<16x256xi32>
    %cst_20 = arith.constant 0.000000e+00 : f32
    %34 = vector.broadcast %cst_20 : f32 to vector<16x256xf32>
    %35 = arith.select %33, %29, %34 : vector<16x256xi1>, vector<16x256xf32>
    %36 = arith.addf %26, %35 : vector<16x256xf32>
    %c2_21 = arith.constant 2 : index
    %c0_22 = arith.constant 0 : index
    %c0_23 = arith.constant 0 : index
    %37 = vector.load %arg3[%c2_21, %c0_22, %c0_23] : memref<4x16x256xf32, #tpu.memory_space<vmem>>, vector<1x16x256xf32>
    %38 = vector.shape_cast %37 : vector<1x16x256xf32> to vector<16x256xf32>
    %39 = arith.subf %38, %14 : vector<16x256xf32>
    %40 = math.exp %39 : vector<16x256xf32>
    %41 = arith.addf %31, %40 : vector<16x256xf32>
    %c2_i32 = arith.constant 2 : i32
    %42 = vector.broadcast %c2_i32 : i32 to vector<16x256xi32>
    %43 = arith.cmpi eq, %3, %42 : vector<16x256xi32>
    %cst_24 = arith.constant 0.000000e+00 : f32
    %44 = vector.broadcast %cst_24 : f32 to vector<16x256xf32>
    %45 = arith.select %43, %39, %44 : vector<16x256xi1>, vector<16x256xf32>
    %46 = arith.addf %36, %45 : vector<16x256xf32>
    %c3_25 = arith.constant 3 : index
    %c0_26 = arith.constant 0 : index
    %c0_27 = arith.constant 0 : index
    %47 = vector.load %arg3[%c3_25, %c0_26, %c0_27] : memref<4x16x256xf32, #tpu.memory_space<vmem>>, vector<1x16x256xf32>
    %48 = vector.shape_cast %47 : vector<1x16x256xf32> to vector<16x256xf32>
    %49 = arith.subf %48, %14 : vector<16x256xf32>
    %50 = math.exp %49 : vector<16x256xf32>
    %51 = arith.addf %41, %50 : vector<16x256xf32>
    %c3_i32 = arith.constant 3 : i32
    %52 = vector.broadcast %c3_i32 : i32 to vector<16x256xi32>
    %53 = arith.cmpi eq, %3, %52 : vector<16x256xi32>
    %cst_28 = arith.constant 0.000000e+00 : f32
    %54 = vector.broadcast %cst_28 : f32 to vector<16x256xf32>
    %55 = arith.select %53, %49, %54 : vector<16x256xi1>, vector<16x256xf32>
    %56 = arith.addf %46, %55 : vector<16x256xf32>
    %c0_i32_29 = arith.constant 0 : i32
    %57 = vector.broadcast %c0_i32_29 : i32 to vector<16x256xi32>
    %58 = arith.cmpi sge, %3, %57 : vector<16x256xi32>
    %59 = math.log %51 : vector<16x256xf32>
    %60 = arith.subf %59, %56 : vector<16x256xf32>
    %cst_30 = arith.constant 0.000000e+00 : f32
    %61 = vector.broadcast %cst_30 : f32 to vector<16x256xf32>
    %62 = arith.select %58, %60, %61 : vector<16x256xi1>, vector<16x256xf32>
    %c0_31 = arith.constant 0 : index
    %c0_32 = arith.constant 0 : index
    %63 = vector.load %arg5[%c0_31, %c0_32] : memref<8x256xf32, #tpu.memory_space<vmem>>, vector<8x256xf32>
    %64 = vector.shape_cast %62 : vector<16x256xf32> to vector<2x8x256xf32>
    %cst_33 = arith.constant dense<0.000000e+00> : vector<8x256xf32>
    %65 = vector.multi_reduction <add>, %64, %cst_33 [0] : vector<2x8x256xf32> to vector<8x256xf32>
    %66 = arith.addf %63, %65 : vector<8x256xf32>
    %c0_34 = arith.constant 0 : index
    %c0_35 = arith.constant 0 : index
    %67 = vector.load %arg5[%c0_34, %c0_35] : memref<8x256xf32, #tpu.memory_space<vmem>>, vector<8x256xf32>
    tpu.vector_store %arg5[%c0_34, %c0_35], %66 {strides = array<i32>} : memref<8x256xf32, #tpu.memory_space<vmem>>, vector<8x256xf32>,
    return
  }
  func.func @transform_0(%arg0: i32, %arg1: i32, %arg2: i32) -> (i32, i32, i32) {
    %c1_i32 = arith.constant 1 : i32
    %0 = arith.muli %arg0, %c1_i32 : i32
    %1 = arith.addi %0, %arg2 : i32
    %c0_i32 = arith.constant 0 : i32
    %c0_i32_0 = arith.constant 0 : i32
    return %c0_i32, %1, %arg1 : i32, i32, i32
  }
  func.func @transform_1(%arg0: i32, %arg1: i32, %arg2: i32) -> (i32, i32) {
    %c1_i32 = arith.constant 1 : i32
    %0 = arith.muli %arg0, %c1_i32 : i32
    %1 = arith.addi %0, %arg2 : i32
    %c0_i32 = arith.constant 0 : i32
    return %1, %arg1 : i32, i32
  }
  func.func @transform_2(%arg0: i32, %arg1: i32, %arg2: i32) -> (i32, i32) {
    %c0_i32 = arith.constant 0 : i32
    return %arg0, %arg1 : i32, i32
  }
}

module attributes {stable_mosaic.version = 11 : i64} {
  func.func @_l1_partial_kernel(%arg0: i32, %arg1: i32, %arg2: memref<8x128xf32, #tpu.memory_space<vmem>>, %arg3: memref<8x128xf32, #tpu.memory_space<vmem>>) attributes {dimension_semantics = [#tpu.dimension_semantics<parallel>, #tpu.dimension_semantics<arbitrary>], iteration_bounds = array<i64: 1, 1>, scalar_prefetch = 0 : i64, scratch_operands = 0 : i64, tpu.core_type = #tpu.core_type<tc>, window_params = [{transform_indices = @transform_0, window_bounds = array<i64: 8, 128>}, {transform_indices = @transform_1, window_bounds = array<i64: 8, 128>}]} {
    %c0_i32 = arith.constant 0 : i32
    %0 = arith.cmpi eq, %arg1, %c0_i32 : i32
    %1 = arith.extui %0 : i1 to i32
    %c0_i32_0 = arith.constant 0 : i32
    %2 = arith.cmpi ne, %1, %c0_i32_0 : i32
    scf.if %2 {
      %cst_6 = arith.constant 0.000000e+00 : f32
      %10 = vector.broadcast %cst_6 : f32 to vector<8x128xf32>
      %c0_7 = arith.constant 0 : index
      %c0_8 = arith.constant 0 : index
      %11 = vector.load %arg3[%c0_7, %c0_8] : memref<8x128xf32, #tpu.memory_space<vmem>>, vector<8x128xf32>
      tpu.vector_store %arg3[%c0_7, %c0_8], %10 {strides = array<i32>} : memref<8x128xf32, #tpu.memory_space<vmem>>, vector<8x128xf32>,
    } else {
    }
    %c0 = arith.constant 0 : index
    %c0_1 = arith.constant 0 : index
    %3 = vector.load %arg2[%c0, %c0_1] : memref<8x128xf32, #tpu.memory_space<vmem>>, vector<8x128xf32>
    %c0_2 = arith.constant 0 : index
    %c0_3 = arith.constant 0 : index
    %4 = vector.load %arg3[%c0_2, %c0_3] : memref<8x128xf32, #tpu.memory_space<vmem>>, vector<8x128xf32>
    %5 = math.absf %3 : vector<8x128xf32>
    %6 = vector.shape_cast %5 : vector<8x128xf32> to vector<1x8x128xf32>
    %cst = arith.constant dense<0.000000e+00> : vector<8x128xf32>
    %7 = vector.multi_reduction <add>, %6, %cst [0] : vector<1x8x128xf32> to vector<8x128xf32>
    %8 = arith.addf %4, %7 : vector<8x128xf32>
    %c0_4 = arith.constant 0 : index
    %c0_5 = arith.constant 0 : index
    %9 = vector.load %arg3[%c0_4, %c0_5] : memref<8x128xf32, #tpu.memory_space<vmem>>, vector<8x128xf32>
    tpu.vector_store %arg3[%c0_4, %c0_5], %8 {strides = array<i32>} : memref<8x128xf32, #tpu.memory_space<vmem>>, vector<8x128xf32>,
    return
  }
  func.func @transform_0(%arg0: i32, %arg1: i32) -> (i32, i32) {
    %c1_i32 = arith.constant 1 : i32
    %0 = arith.muli %arg0, %c1_i32 : i32
    %1 = arith.addi %0, %arg1 : i32
    %c0_i32 = arith.constant 0 : i32
    %c0_i32_0 = arith.constant 0 : i32
    return %1, %c0_i32 : i32, i32
  }
  func.func @transform_1(%arg0: i32, %arg1: i32) -> (i32, i32) {
    %c0_i32 = arith.constant 0 : i32
    %c0_i32_0 = arith.constant 0 : i32
    return %arg0, %c0_i32 : i32, i32
  }
}

</mosaic_0001>

<llo_original>
// kernel: seg_trace_loss.3
$region0: #{seg_trace_loss.3}
  #allocation0 [shape = 'u32[]', space=smem, size = 0x4, offset = 0x4, fixed_abs, tag = 'smem constant byte address 0x4 - core index']
  #allocation1 [shape = 'u32[144,128]{1,0:T(1,128)}', space=vmem, size = 0x12000, scoped, tag = 'internal scratch']
  %s0 = inlined_call_operand.vmem [shape: f32[4,16,256], index: 0, kind: input, shape index: {}]
  %s1 = inlined_call_operand.vmem [shape: s32[16,256], index: 1, kind: input, shape index: {}]
  %s2 = inlined_call_operand.vmem [shape: f32[8,256], index: 2, kind: output, shape index: {}]
  %s3 = sld [smem:[#allocation0]]
  $region22: #{seg_trace_loss.3} parent=0
    _
  %s5 = ssub.s32 1, %s3
  %s6 = scalar_select 0, %s5, %s3
  // Predicated region
  $region2: #{seg_trace_loss.3} parent=0 // pred_check
    _
  $region3: #{seg_trace_loss.3} parent=0 // pred_check_branch
    %8 = sbr.rel (0) target = $region5
  $region4: #{seg_trace_loss.3} parent=0 // pred_region
    %s9 = sadd.s32 0, 0
    %s10 = smul.u32 2, %s9
    %p11 = scmp.lt.s32.totalorder %s10, 1
    %s12 = scalar_select %p11, %s10, 1
    %s13 = smul.addr %s12, 2
    %s14 = smul.addr %s13, 8
    %s15 = scalar_lea.vmem %s0, %s14
    %s16 = sadd.s32 0, 0
    %s17 = smul.u32 2, %s16
  $region5: #{seg_trace_loss.3} parent=0 // pred_fallthru
    _
  // Predicated region
  $region6: #{seg_trace_loss.3} parent=0 // pred_check
    _
  $region7: #{seg_trace_loss.3} parent=0 // pred_check_branch
    %19 = sbr.rel (0) target = $region9
  $region8: #{seg_trace_loss.3} parent=0 // pred_region
    %s20 = sadd.s32 0, 0
    %s21 = smul.u32 2, %s20
    %p22 = scmp.lt.s32.totalorder %s21, 1
    %s23 = scalar_select %p22, %s21, 1
    %s24 = smul.addr %s23, 2
    %s25 = smul.addr %s24, 8
    %s26 = scalar_lea.vmem %s1, %s25
    %s27 = sadd.s32 0, 0
    %s28 = smul.u32 2, %s27
  $region9: #{seg_trace_loss.3} parent=0 // pred_fallthru
    _
  %s29 = sadd.s32 0, 0
  %s30 = smul.u32 2, %s29
  %p31 = scmp.lt.s32.totalorder %s30, 1
  %s32 = scalar_select %p31, %s30, 1
  %s33 = smul.addr %s32, 2
  %s34 = smul.addr %s33, 8
  %s35 = scalar_lea.vmem %s0, %s34
  %s36 = sadd.s32 0, 0
  %s37 = smul.u32 2, %s36
  %p38 = scmp.lt.s32.totalorder %s37, 1
  %s39 = scalar_select %p38, %s37, 1
  %s40 = smul.addr %s39, 2
  %s41 = smul.addr %s40, 8
  %s42 = scalar_lea.vmem %s1, %s41
  %s43 = sadd.s32 0, 0
  %s44 = smul.u32 2, %s43
  %p45 = scmp.lt.s32.totalorder %s44, 1
  %s46 = scalar_select %p45, %s44, 1
  %s47 = smul.addr %s46, 2
  %s48 = smul.addr %s47, 8
  %s49 = scalar_lea.vmem %s0, %s48
  %s50 = sadd.s32 0, 0
  %s51 = smul.u32 2, %s50
  %s52 = sadd.s32 0, 0
  %s53 = smul.u32 2, %s52
  %p54 = scmp.lt.s32.totalorder %s53, 1
  %s55 = scalar_select %p54, %s53, 1
  %s56 = smul.addr %s55, 2
  %s57 = smul.addr %s56, 8
  %s58 = scalar_lea.vmem %s1, %s57
  %s59 = sadd.s32 0, 0
  %s60 = smul.u32 2, %s59
  %p61 = scmp.eq.s32.totalorder 0, 0
  // Predicated region
  $region10: #{seg_trace_loss.3} parent=0 // pred_check
    %p62 = pneg %p61
  $region11: #{seg_trace_loss.3} parent=0 // pred_check_branch
    %64 = sbr.rel (%p62) target = $region13
  $region12: #{seg_trace_loss.3} parent=0 // pred_region
    %65 = vst [vmem:[%s2] sm:$0xff] 0.0
    %66 = vst [vmem:[%s2 + $0x8] sm:$0xff] 0.0
  $region13: #{seg_trace_loss.3} parent=0 // pred_fallthru
    _
  %v67 = vld [vmem:[%s58] sm:$0xff]
  %v68 = vld [vmem:[%s58 + $0x8] sm:$0xff]
  %v69 = vld [vmem:[%s58 + $0x10] sm:$0xff]
  %v70 = vld [vmem:[%s58 + $0x18] sm:$0xff]
  %v71 = vld [vmem:[%s49] sm:$0xff]
  %v72 = vld [vmem:[%s49 + $0x8] sm:$0xff]
  %v73 = vld [vmem:[%s49 + $0x10] sm:$0xff]
  %v74 = vld [vmem:[%s49 + $0x18] sm:$0xff]
  %s75 = scalar_lea.vmem %s49, 32
  %v76 = vld [vmem:[%s75] sm:$0xff]
  %v77 = vld [vmem:[%s75 + $0x8] sm:$0xff]
  %v78 = vld [vmem:[%s75 + $0x10] sm:$0xff]
  %v79 = vld [vmem:[%s75 + $0x18] sm:$0xff]
  %v80 = vmax.f32 %v71, %v76
  %v81 = vmax.f32 %v72, %v77
  %v82 = vmax.f32 %v73, %v78
  %v83 = vmax.f32 %v74, %v79
  %s84 = scalar_lea.vmem %s49, 64
  %v85 = vld [vmem:[%s84] sm:$0xff]
  %v86 = vld [vmem:[%s84 + $0x8] sm:$0xff]
  %v87 = vld [vmem:[%s84 + $0x10] sm:$0xff]
  %v88 = vld [vmem:[%s84 + $0x18] sm:$0xff]
  %v89 = vmax.f32 %v80, %v85
  %v90 = vmax.f32 %v81, %v86
  %v91 = vmax.f32 %v82, %v87
  %v92 = vmax.f32 %v83, %v88
  %s93 = scalar_lea.vmem %s49, 96
  %v94 = vld [vmem:[%s93] sm:$0xff]
  %v95 = vld [vmem:[%s93 + $0x8] sm:$0xff]
  %v96 = vld [vmem:[%s93 + $0x10] sm:$0xff]
  %v97 = vld [vmem:[%s93 + $0x18] sm:$0xff]
  %v98 = vmax.f32 %v89, %v94
  %v99 = vmax.f32 %v90, %v95
  %v100 = vmax.f32 %v91, %v96
  %v101 = vmax.f32 %v92, %v97
  %v102 = vsub.f32 %v71, %v98
  %v103 = vsub.f32 %v72, %v99
  %v104 = vsub.f32 %v73, %v100
  %v105 = vsub.f32 %v74, %v101
  %v106 = vmul.f32 %v102, 1.442695
  %v107 = vpow.pop %v106
  %v108 = vmul.f32 %v103, 1.442695
  %v109 = vpow.pop %v108
  %v110 = vmul.f32 %v104, 1.442695
  %v111 = vpow.pop %v110
  %v112 = vmul.f32 %v105, 1.442695
  %v113 = vpow.pop %v112
  %v114 = vadd.f32 %v107, 0.0
  %v115 = vadd.f32 %v109, 0.0
  %v116 = vadd.f32 %v111, 0.0
  %v117 = vadd.f32 %v113, 0.0
  %vm118 = vcmp.eq.s32.totalorder %v67, 0
  %vm119 = vcmp.eq.s32.totalorder %v68, 0
  %vm120 = vcmp.eq.s32.totalorder %v69, 0
  %vm121 = vcmp.eq.s32.totalorder %v70, 0
  %v122 = vsel %vm118, %v102, 0.0
  %v123 = vsel %vm119, %v103, 0.0
  %v124 = vsel %vm120, %v104, 0.0
  %v125 = vsel %vm121, %v105, 0.0
  %v126 = vadd.f32 %v122, 0.0
  %v127 = vadd.f32 %v123, 0.0
  %v128 = vadd.f32 %v124, 0.0
  %v129 = vadd.f32 %v125, 0.0
  %v130 = vsub.f32 %v76, %v98
  %v131 = vsub.f32 %v77, %v99
  %v132 = vsub.f32 %v78, %v100
  %v133 = vsub.f32 %v79, %v101
  %v134 = vmul.f32 %v130, 1.442695
  %v135 = vpow.pop %v134
  %v136 = vmul.f32 %v131, 1.442695
  %v137 = vpow.pop %v136
  %v138 = vmul.f32 %v132, 1.442695
  %v139 = vpow.pop %v138
  %v140 = vmul.f32 %v133, 1.442695
  %v141 = vpow.pop %v140
  %v142 = vadd.f32 %v114, %v135
  %v143 = vadd.f32 %v115, %v137
  %v144 = vadd.f32 %v116, %v139
  %v145 = vadd.f32 %v117, %v141
  %vm146 = vcmp.eq.s32.totalorder %v67, 1
  %vm147 = vcmp.eq.s32.totalorder %v68, 1
  %vm148 = vcmp.eq.s32.totalorder %v69, 1
  %vm149 = vcmp.eq.s32.totalorder %v70, 1
  %v150 = vsel %vm146, %v130, 0.0
  %v151 = vsel %vm147, %v131, 0.0
  %v152 = vsel %vm148, %v132, 0.0
  %v153 = vsel %vm149, %v133, 0.0
  %v154 = vadd.f32 %v126, %v150
  %v155 = vadd.f32 %v127, %v151
  %v156 = vadd.f32 %v128, %v152
  %v157 = vadd.f32 %v129, %v153
  %v158 = vsub.f32 %v85, %v98
  %v159 = vsub.f32 %v86, %v99
  %v160 = vsub.f32 %v87, %v100
  %v161 = vsub.f32 %v88, %v101
  %v162 = vmul.f32 %v158, 1.442695
  %v163 = vpow.pop %v162
  %v164 = vmul.f32 %v159, 1.442695
  %v165 = vpow.pop %v164
  %v166 = vmul.f32 %v160, 1.442695
  %v167 = vpow.pop %v166
  %v168 = vmul.f32 %v161, 1.442695
  %v169 = vpow.pop %v168
  %v170 = vadd.f32 %v142, %v163
  %v171 = vadd.f32 %v143, %v165
  %v172 = vadd.f32 %v144, %v167
  %v173 = vadd.f32 %v145, %v169
  %vm174 = vcmp.eq.s32.totalorder %v67, 2
  %vm175 = vcmp.eq.s32.totalorder %v68, 2
  %vm176 = vcmp.eq.s32.totalorder %v69, 2
  %vm177 = vcmp.eq.s32.totalorder %v70, 2
  %v178 = vsel %vm174, %v158, 0.0
  %v179 = vsel %vm175, %v159, 0.0
  %v180 = vsel %vm176, %v160, 0.0
  %v181 = vsel %vm177, %v161, 0.0
  %v182 = vadd.f32 %v154, %v178
  %v183 = vadd.f32 %v155, %v179
  %v184 = vadd.f32 %v156, %v180
  %v185 = vadd.f32 %v157, %v181
  %v186 = vsub.f32 %v94, %v98
  %v187 = vsub.f32 %v95, %v99
  %v188 = vsub.f32 %v96, %v100
  %v189 = vsub.f32 %v97, %v101
  %v190 = vmul.f32 %v186, 1.442695
  %v191 = vpow.pop %v190
  %v192 = vmul.f32 %v187, 1.442695
  %v193 = vpow.pop %v192
  %v194 = vmul.f32 %v188, 1.442695
  %v195 = vpow.pop %v194
  %v196 = vmul.f32 %v189, 1.442695
  %v197 = vpow.pop %v196
  %v198 = vadd.f32 %v170, %v191
  %v199 = vadd.f32 %v171, %v193
  %v200 = vadd.f32 %v172, %v195
  %v201 = vadd.f32 %v173, %v197
  %vm202 = vcmp.eq.s32.totalorder %v67, 3
  %vm203 = vcmp.eq.s32.totalorder %v68, 3
  %vm204 = vcmp.eq.s32.totalorder %v69, 3
  %vm205 = vcmp.eq.s32.totalorder %v70, 3
  %v206 = vsel %vm202, %v186, 0.0
  %v207 = vsel %vm203, %v187, 0.0
  %v208 = vsel %vm204, %v188, 0.0
  %v209 = vsel %vm205, %v189, 0.0
  %v210 = vadd.f32 %v182, %v206
  %v211 = vadd.f32 %v183, %v207
  %v212 = vadd.f32 %v184, %v208
  %v213 = vadd.f32 %v185, %v209
  %vm214 = vcmp.ge.s32.totalorder %v67, 0
  %vm215 = vcmp.ge.s32.totalorder %v68, 0
  %vm216 = vcmp.ge.s32.totalorder %v69, 0
  %vm217 = vcmp.ge.s32.totalorder %v70, 0
  %v218 = vlog2.pop %v198
  %v219 = vmul.f32 %v218, 0.6931472
  %v220 = vlog2.pop %v199
  %v221 = vmul.f32 %v220, 0.6931472
  %v222 = vlog2.pop %v200
  %v223 = vmul.f32 %v222, 0.6931472
  %v224 = vlog2.pop %v201
  %v225 = vmul.f32 %v224, 0.6931472
  %v226 = vsub.f32 %v219, %v210
  %v227 = vsub.f32 %v221, %v211
  %v228 = vsub.f32 %v223, %v212
  %v229 = vsub.f32 %v225, %v213
  %v230 = vsel %vm214, %v226, 0.0
  %v231 = vsel %vm215, %v227, 0.0
  %v232 = vsel %vm216, %v228, 0.0
  %v233 = vsel %vm217, %v229, 0.0
  %v234 = vld [vmem:[%s2] sm:$0xff]
  %v235 = vld [vmem:[%s2 + $0x8] sm:$0xff]
  %v236 = vadd.f32 %v230, %v232
  %v237 = vadd.f32 %v231, %v233
  %v238 = vadd.f32 %v234, %v236
  %v239 = vadd.f32 %v235, %v237
  %240 = vst [vmem:[%s2] sm:$0xff] %v238
  %241 = vst [vmem:[%s2 + $0x8] sm:$0xff] %v239
  // Predicated region
  $region14: #{seg_trace_loss.3} parent=0 // pred_check
    _
  $region15: #{seg_trace_loss.3} parent=0 // pred_check_branch
    %243 = sbr.rel (0) target = $region17
  $region16: #{seg_trace_loss.3} parent=0 // pred_region
    _
  $region17: #{seg_trace_loss.3} parent=0 // pred_fallthru
    _
  // Predicated region
  $region18: #{seg_trace_loss.3} parent=0 // pred_check
    _
  $region19: #{seg_trace_loss.3} parent=0 // pred_check_branch
    %245 = sbr.rel (0) target = $region21
  $region20: #{seg_trace_loss.3} parent=0 // pred_region
    _
  $region21: #{seg_trace_loss.3} parent=0 // pred_fallthru
    _

// kernel: seg_trace_loss.2
$region0: #{seg_trace_loss.2}
  #allocation0 [shape = 'u32[]', space=smem, size = 0x4, offset = 0x4, fixed_abs, tag = 'smem constant byte address 0x4 - core index']
  #allocation1 [shape = 'u32[144,128]{1,0:T(1,128)}', space=vmem, size = 0x12000, scoped, tag = 'internal scratch']
  %s0 = inlined_call_operand.vmem [shape: f32[8,128], index: 0, kind: input, shape index: {}]
  %s1 = inlined_call_operand.vmem [shape: f32[8,128], index: 1, kind: output, shape index: {}]
  %s2 = sld [smem:[#allocation0]]
  $region18: #{seg_trace_loss.2} parent=0
    _
  %s4 = ssub.s32 1, %s2
  %s5 = scalar_select 0, %s4, %s2
  // Predicated region
  $region2: #{seg_trace_loss.2} parent=0 // pred_check
    _
  $region3: #{seg_trace_loss.2} parent=0 // pred_check_branch
    %7 = sbr.rel (0) target = $region5
  $region4: #{seg_trace_loss.2} parent=0 // pred_region
    %s8 = sadd.s32 0, 0
    %p9 = scmp.lt.s32.totalorder %s8, 0
    %s10 = scalar_select %p9, %s8, 0
    %s11 = smul.addr %s10, 8
    %s12 = scalar_lea.vmem %s0, %s11
    %s13 = sadd.s32 0, 0
  $region5: #{seg_trace_loss.2} parent=0 // pred_fallthru
    _
  %s14 = sadd.s32 0, 0
  %p15 = scmp.lt.s32.totalorder %s14, 0
  %s16 = scalar_select %p15, %s14, 0
  %s17 = smul.addr %s16, 8
  %s18 = scalar_lea.vmem %s0, %s17
  %s19 = sadd.s32 0, 0
  %p20 = scmp.lt.s32.totalorder %s19, 0
  %s21 = scalar_select %p20, %s19, 0
  %s22 = smul.addr %s21, 8
  %s23 = scalar_lea.vmem %s0, %s22
  %s24 = sadd.s32 0, 0
  %p25 = scmp.eq.s32.totalorder 0, 0
  // Predicated region
  $region6: #{seg_trace_loss.2} parent=0 // pred_check
    %p26 = pneg %p25
  $region7: #{seg_trace_loss.2} parent=0 // pred_check_branch
    %28 = sbr.rel (%p26) target = $region9
  $region8: #{seg_trace_loss.2} parent=0 // pred_region
    %29 = vst [vmem:[%s1] sm:$0xff] 0.0
  $region9: #{seg_trace_loss.2} parent=0 // pred_fallthru
    _
  %v30 = vld [vmem:[%s23] sm:$0xff]
  %v31 = vld [vmem:[%s1] sm:$0xff]
  %v32 = vand.u32 2147483647, %v30
  %v33 = vadd.f32 %v32, 0.0
  %v34 = vadd.f32 %v31, %v33
  %35 = vst [vmem:[%s1] sm:$0xff] %v34
  // Predicated region
  $region10: #{seg_trace_loss.2} parent=0 // pred_check
    _
  $region11: #{seg_trace_loss.2} parent=0 // pred_check_branch
    %37 = sbr.rel (0) target = $region13
  $region12: #{seg_trace_loss.2} parent=0 // pred_region
    _
  $region13: #{seg_trace_loss.2} parent=0 // pred_fallthru
    _
  // Predicated region
  $region14: #{seg_trace_loss.2} parent=0 // pred_check
    _
  $region15: #{seg_trace_loss.2} parent=0 // pred_check_branch
    %39 = sbr.rel (0) target = $region17
  $region16: #{seg_trace_loss.2} parent=0 // pred_region
    _
  $region17: #{seg_trace_loss.2} parent=0 // pred_fallthru
    _

</llo_original>
